<compile_context>
chip_gen: v6e
topology: v6e:2x2x1
jax: 0.10.0
libtpu: 0.0.40
codegen_flags: <defaults>
</compile_context>

<pallas_src>
import functools

import jax
import jax.numpy as jnp
from jax.experimental import pallas as pl
from jax.experimental.pallas import tpu as pltpu


# ---------------------------------------------------------------------------
# Kernels
# ---------------------------------------------------------------------------
def _se_fused_kernel(x_ref, w1_ref, w2_ref, out_ref, *, inv_hw):
    """Single-pass SE: pool + MLP + sigmoid + broadcast multiply on one slab."""
    x = x_ref[...]                                            # (TB, C, HW)
    avg = jnp.sum(x, axis=-1, dtype=jnp.float32) * inv_hw     # (TB, C) true mean
    h = jnp.maximum(
        jnp.dot(avg.astype(w1_ref.dtype), w1_ref[...],
                preferred_element_type=jnp.float32), 0.0)     # (TB, Cr) ReLU
    y = jnp.dot(h.astype(w2_ref.dtype), w2_ref[...],
                preferred_element_type=jnp.float32)           # (TB, C)
    scale = jax.nn.sigmoid(y).astype(x.dtype)                 # (TB, C)
    out_ref[...] = x * scale[:, :, None]


def _se_pool_kernel(x_ref, sum_ref, acc_ref, *, hw, thw, masked):
    """Streaming global-sum over the spatial axis.

    x_ref  : (TB, TC, THW)   spatial tile (THW multiple of 128, ragged tail OK)
    sum_ref: (TB, TC) f32    spatial sum output (written at last spatial step)
    acc_ref: (TB, TC, 128)   f32 VMEM accumulator (VPU adds; lane reduce once)
    """
    s = pl.program_id(2)

    @pl.when(s == 0)
    def _init():
        acc_ref[...] = jnp.zeros_like(acc_ref)

    x = x_ref[...]
    if masked:
        # Zero out lanes past the true spatial extent (ragged tail tile).
        lane = jax.lax.broadcasted_iota(jnp.int32, x.shape, dimension=2)
        valid = (s * thw + lane) < hw
        x = jnp.where(valid, x, jnp.zeros_like(x))

    # 128-lane-aligned slices of a loaded value are relayout-free, so this is
    # pure VPU accumulation; the single XLU cross-lane reduce is deferred to
    # the finalize branch below.
    nchunks = thw // 128
    partial = x[:, :, 0:128].astype(jnp.float32)
    for k in range(1, nchunks):
        partial = partial + x[:, :, k * 128:(k + 1) * 128].astype(jnp.float32)
    acc_ref[...] += partial

    @pl.when(s == pl.num_programs(2) - 1)
    def _finalize():
        sum_ref[...] = jnp.sum(acc_ref[...], axis=-1)


def _se_mlp_kernel(sum_ref, w1_ref, w2_ref, scale_ref, *, inv_hw):
    """mean -> Linear -> ReLU -> Linear -> Sigmoid on the pooled (B, C)."""
    avg = sum_ref[...] * inv_hw                               # (B, C) f32 mean
    h = jnp.maximum(
        jnp.dot(avg.astype(w1_ref.dtype), w1_ref[...],
                preferred_element_type=jnp.float32), 0.0)     # (B, Cr)
    y = jnp.dot(h.astype(w2_ref.dtype), w2_ref[...],
                preferred_element_type=jnp.float32)           # (B, C)
    scale_ref[...] = jax.nn.sigmoid(y).astype(scale_ref.dtype)


def _se_apply_kernel(x_ref, scale_ref, out_ref):
    """out = x * scale, scale pre-shaped (TB, TC, 1) in x.dtype -> lane splat."""
    out_ref[...] = x_ref[...] * scale_ref[...]


# ---------------------------------------------------------------------------
# VMEM budgeting & tile selection
# ---------------------------------------------------------------------------
def _vmem_capacity_bytes():
    default = 64 * 1024 * 1024  # v7x per-TensorCore physical VMEM (the smallest)
    try:
        info = pltpu.get_tpu_info()
        cap = getattr(info, "vmem_capacity_bytes", None)
        if cap is not None and int(cap) > 0:
            return int(cap)
    except Exception:
        pass
    return default


def _batch_tile_candidates(B):
    # Divisors of B up to 8 (second-to-last dim of 2-D blocks must be a
    # multiple of 8 or full; small TB also gives a parallel axis), descending.
    return sorted({t for t in range(1, min(B, 8) + 1) if B % t == 0},
                  reverse=True)


def _pick_tc(tb, C, itemsize, tile_budget):
    # Output block (TB, TC) forces TC to be a multiple of 128 or the full C.
    if C % 128 != 0 or C <= 128:
        return C
    cands = [d for d in range(128, C, 128) if C % d == 0]   # proper divisors
    if not cands:
        return C
    fitting = [d for d in cands if tb * d * 128 * itemsize <= tile_budget]
    # Largest fitting proper divisor -> at least 2 C-tiles (megacore work on
    # v7x even when nb == 1) while keeping a minimal 128-lane tile in budget.
    return max(fitting) if fitting else min(cands)


def _pick_thw(rows, HW, itemsize, tile_budget, max_lanes=4096):
    # Largest 128-multiple spatial tile within the byte budget; capped so the
    # in-kernel chunk accumulation unrolls to at most 32 VPU adds.
    hw_pad = pl.cdiv(HW, 128) * 128
    by_budget = tile_budget // max(1, rows * itemsize)
    thw = min(max_lanes, by_budget, hw_pad)
    return max(128, (thw // 128) * 128)


# ---------------------------------------------------------------------------
# Wrapper
# ---------------------------------------------------------------------------
def se_layer(x_nchw, w1, w2, *, path=None):
    """SElayer forward.

    x_nchw: (B, C, H, W)
    w1:     (Cr, C)  = nn.Linear(C, Cr, bias=False).weight
    w2:     (C, Cr)  = nn.Linear(Cr, C, bias=False).weight
    path:   None (auto) | "fused" | "streaming"
    returns (B, C, H, W) = x * sigmoid(MLP(avgpool(x)))
    """
    B, C, H, W = x_nchw.shape
    Cr = w1.shape[0]
    HW = H * W
    dtype = x_nchw.dtype
    itemsize = jnp.dtype(dtype).itemsize
    w_itemsize = jnp.dtype(w1.dtype).itemsize

    x_flat = x_nchw.reshape(B, C, HW)        # spatial on the lane axis
    w1_t = jnp.transpose(w1)                 # (C, Cr): C contracts
    w2_t = jnp.transpose(w2)                 # (Cr, C): output C on lanes
    inv_hw = 1.0 / float(HW)

    cap = _vmem_capacity_bytes()
    budget = (cap * 3) // 4                              # ~48 MiB v7x, ~96 MiB v5e/v6e
    vmem_limit = int(min(cap - (4 << 20), budget + (16 << 20)))
    w_bytes = 2 * C * Cr * w_itemsize

    # ---- fused single-pass fast path (x read once, written once) -----------
    fused_tb = None
    if path != "streaming":
        for t in _batch_tile_candidates(B):
            # ~4x slab for double-buffered in/out + headroom for f32 temps.
            if 5 * t * C * HW * itemsize + 2 * w_bytes + (2 << 20) <= budget:
                fused_tb = t
                break
    if path == "fused" and fused_tb is None:
        raise ValueError("fused path requested but slab does not fit VMEM budget")

    if fused_tb is not None:
        TB = fused_tb
        nb = B // TB
        out = pl.pallas_call(
            functools.partial(_se_fused_kernel, inv_hw=inv_hw),
            out_shape=jax.ShapeDtypeStruct((B, C, HW), dtype),
            grid=(nb,),
            in_specs=[
                pl.BlockSpec((TB, C, HW), lambda b: (b, 0, 0)),
                pl.BlockSpec((C, Cr), lambda b: (0, 0)),
                pl.BlockSpec((Cr, C), lambda b: (0, 0)),
            ],
            out_specs=pl.BlockSpec((TB, C, HW), lambda b: (b, 0, 0)),
            compiler_params=pltpu.CompilerParams(
                dimension_semantics=("parallel",),
                vmem_limit_bytes=vmem_limit),
            cost_estimate=pl.CostEstimate(
                flops=2 * B * C * HW + 4 * B * C * Cr,
                transcendentals=B * C,
                bytes_accessed=2 * B * C * HW * itemsize + 2 * C * Cr * w_itemsize),
        )(x_flat, w1_t, w2_t)
        return out.reshape(B, C, H, W)

    # ---- streaming fallback -------------------------------------------------
    TB = _batch_tile_candidates(B)[0]
    nb = B // TB
    tile_budget = budget // 5            # pass 2 holds ~4 live tiles + margin
    TC = _pick_tc(TB, C, itemsize, tile_budget)
    nc = C // TC
    THW = _pick_thw(TB * TC, HW, itemsize, tile_budget)
    ns = pl.cdiv(HW, THW)
    masked = (HW % THW) != 0

    # pass 1: global spatial sum (pool-only; no weights in the hot stream)
    pooled = pl.pallas_call(
        functools.partial(_se_pool_kernel, hw=HW, thw=THW, masked=masked),
        out_shape=jax.ShapeDtypeStruct((B, C), jnp.float32),
        grid=(nb, nc, ns),
        in_specs=[pl.BlockSpec((TB, TC, THW), lambda b, c, s: (b, c, s))],
        out_specs=pl.BlockSpec((TB, TC), lambda b, c, s: (b, c)),
        scratch_shapes=[pltpu.VMEM((TB, TC, 128), jnp.float32)],
        compiler_params=pltpu.CompilerParams(
            dimension_semantics=("parallel", "parallel", "arbitrary"),
            vmem_limit_bytes=vmem_limit),
        cost_estimate=pl.CostEstimate(
            flops=B * C * HW, transcendentals=0,
            bytes_accessed=B * C * HW * itemsize + B * C * 4),
    )(x_flat)

    # MLP micro-kernel on the pooled (B, C): mean, Linear/ReLU/Linear/Sigmoid
    scale = pl.pallas_call(
        functools.partial(_se_mlp_kernel, inv_hw=inv_hw),
        out_shape=jax.ShapeDtypeStruct((B, C), dtype),
        grid=(1,),
        in_specs=[
            pl.BlockSpec((B, C), lambda i: (0, 0)),
            pl.BlockSpec((C, Cr), lambda i: (0, 0)),
            pl.BlockSpec((Cr, C), lambda i: (0, 0)),
        ],
        out_specs=pl.BlockSpec((B, C), lambda i: (0, 0)),
        compiler_params=pltpu.CompilerParams(vmem_limit_bytes=vmem_limit),
    )(pooled, w1_t, w2_t)

    # pass 2: out = x * scale; scale fed as (TB, TC, 1) in x.dtype -> lane splat
    scale3 = scale.reshape(B, C, 1)
    out = pl.pallas_call(
        _se_apply_kernel,
        out_shape=jax.ShapeDtypeStruct((B, C, HW), dtype),
        grid=(nb, nc, ns),
        in_specs=[
            pl.BlockSpec((TB, TC, THW), lambda b, c, s: (b, c, s)),
            pl.BlockSpec((TB, TC, 1), lambda b, c, s: (b, c, 0)),
        ],
        out_specs=pl.BlockSpec((TB, TC, THW), lambda b, c, s: (b, c, s)),
        compiler_params=pltpu.CompilerParams(
            dimension_semantics=("parallel", "parallel", "parallel"),
            vmem_limit_bytes=vmem_limit),
        cost_estimate=pl.CostEstimate(
            flops=B * C * HW, transcendentals=0,
            bytes_accessed=2 * B * C * HW * itemsize + B * C * itemsize),
    )(x_flat, scale3)

    return out.reshape(B, C, H, W)


# ---------------------------------------------------------------------------
# Pure-JAX reference (identical semantics to the PyTorch module)
# ---------------------------------------------------------------------------
def se_layer_ref(x, w1, w2):
    B, C, H, W = x.shape
    xf = x.reshape(B, C, H * W).astype(jnp.float32)
    avg = jnp.mean(xf, axis=-1)                               # (B, C)
    h = jnp.maximum(avg @ w1.astype(jnp.float32).T, 0.0)      # (B, Cr)
    y = jax.nn.sigmoid(h @ w2.astype(jnp.float32).T)          # (B, C)
    return (x.astype(jnp.float32) * y[:, :, None, None]).astype(x.dtype)


if __name__ == "__main__":
    key = jax.random.PRNGKey(0)

    def make_case(k, B, C, H, W, reduction):
        kx, k1, k2 = jax.random.split(k, 3)
        Cr = max(1, C // reduction)
        x = jax.random.normal(kx, (B, C, H, W), dtype=jnp.float32)
        w1 = jax.random.normal(k1, (Cr, C), dtype=jnp.float32) * 0.5
        w2 = jax.random.normal(k2, (C, Cr), dtype=jnp.float32) * 0.5
        return x, w1, w2

    ka, kb, kc = jax.random.split(key, 3)
    cases = [
        (make_case(ka, 2, 4, 16, 16, 2), None),         # fused fast path (HW = 256)
        (make_case(ka, 2, 4, 16, 16, 2), "streaming"),  # streaming, HW % 128 == 0
        (make_case(kb, 2, 8, 11, 13, 4), None),         # fused, HW not a 128-multiple
        (make_case(kb, 2, 8, 11, 13, 4), "streaming"),  # streaming, masked ragged tail
        (make_case(kc, 2, 8, 64, 96, 4), "streaming"),  # streaming, multi-tile reduce + mask
    ]
    for (x, w1, w2), p in cases:
        out = se_layer(x, w1, w2, path=p)
        jax.block_until_ready(out)
        ref = se_layer_ref(x, w1, w2)
        assert out.shape == x.shape
        assert jnp.allclose(out, ref, atol=1e-5, rtol=1e-5), (x.shape, p)
    print("KERNEL_OK")
</pallas_src>

<mosaic_0001>
module attributes {stable_mosaic.version = 11 : i64} {
  func.func @_se_fused_kernel(%arg0: i32, %arg1: memref<2x4x256xf32, #tpu.memory_space<vmem>>, %arg2: memref<4x2xf32, #tpu.memory_space<vmem>>, %arg3: memref<2x4xf32, #tpu.memory_space<vmem>>, %arg4: memref<2x4x256xf32, #tpu.memory_space<vmem>>) attributes {dimension_semantics = [#tpu.dimension_semantics<parallel>], iteration_bounds = array<i64: 1>, scalar_prefetch = 0 : i64, scratch_operands = 0 : i64, tpu.core_type = #tpu.core_type<tc>, window_params = [{transform_indices = @transform_0, window_bounds = array<i64: 2, 4, 256>}, {pipeline_mode = #tpu.pipeline_mode<synchronous>, transform_indices = @transform_1, window_bounds = array<i64: 4, 2>}, {pipeline_mode = #tpu.pipeline_mode<synchronous>, transform_indices = @transform_2, window_bounds = array<i64: 2, 4>}, {transform_indices = @transform_3, window_bounds = array<i64: 2, 4, 256>}]} {
    %c0 = arith.constant 0 : index
    %c0_0 = arith.constant 0 : index
    %c0_1 = arith.constant 0 : index
    %0 = vector.load %arg1[%c0, %c0_0, %c0_1] : memref<2x4x256xf32, #tpu.memory_space<vmem>>, vector<2x4x256xf32>
    %cst = arith.constant dense<0.000000e+00> : vector<2x4xf32>
    %1 = vector.multi_reduction <add>, %0, %cst [2] : vector<2x4x256xf32> to vector<2x4xf32>
    %cst_2 = arith.constant 3.906250e-03 : f32
    %2 = vector.broadcast %cst_2 : f32 to vector<2x4xf32>
    %3 = arith.mulf %1, %2 : vector<2x4xf32>
    %c0_3 = arith.constant 0 : index
    %c0_4 = arith.constant 0 : index
    %4 = vector.load %arg2[%c0_3, %c0_4] : memref<4x2xf32, #tpu.memory_space<vmem>>, vector<4x2xf32>
    %cst_5 = arith.constant dense<0.000000e+00> : vector<2x2xf32>
    %5 = tpu.matmul %3, %4, %cst_5 {dimension_numbers = #tpu.dot_dimension_numbers<[1], [0], [0], [1], [0, 0, 1, 1], [], []>} : vector<2x4xf32>, vector<4x2xf32>, vector<2x2xf32> -> vector<2x2xf32>
    %cst_6 = arith.constant 0.000000e+00 : f32
    %6 = vector.broadcast %cst_6 : f32 to vector<2x2xf32>
    %7 = arith.maximumf %5, %6 : vector<2x2xf32>
    %c0_7 = arith.constant 0 : index
    %c0_8 = arith.constant 0 : index
    %8 = vector.load %arg3[%c0_7, %c0_8] : memref<2x4xf32, #tpu.memory_space<vmem>>, vector<2x4xf32>
    %cst_9 = arith.constant dense<0.000000e+00> : vector<2x4xf32>
    %9 = tpu.matmul %7, %8, %cst_9 {dimension_numbers = #tpu.dot_dimension_numbers<[1], [0], [0], [1], [0, 0, 1, 1], [], []>} : vector<2x2xf32>, vector<2x4xf32>, vector<2x4xf32> -> vector<2x4xf32>
    %10 = arith.negf %9 : vector<2x4xf32>
    %11 = math.exp %10 : vector<2x4xf32>
    %cst_10 = arith.constant 1.000000e+00 : f32
    %12 = vector.broadcast %cst_10 : f32 to vector<2x4xf32>
    %13 = arith.addf %12, %11 : vector<2x4xf32>
    %14 = arith.divf %12, %13 : vector<2x4xf32>
    %15 = vector.shape_cast %14 : vector<2x4xf32> to vector<2x4x1xf32>
    %16 = vector.broadcast %15 : vector<2x4x1xf32> to vector<2x4x256xf32>
    %17 = arith.mulf %0, %16 : vector<2x4x256xf32>
    %c0_11 = arith.constant 0 : index
    %c0_12 = arith.constant 0 : index
    %c0_13 = arith.constant 0 : index
    %18 = vector.load %arg4[%c0_11, %c0_12, %c0_13] : memref<2x4x256xf32, #tpu.memory_space<vmem>>, vector<2x4x256xf32>
    tpu.vector_store %arg4[%c0_11, %c0_12, %c0_13], %17 {strides = array<i32>} : memref<2x4x256xf32, #tpu.memory_space<vmem>>, vector<2x4x256xf32>,
    return
  }
  func.func @transform_0(%arg0: i32) -> (i32, i32, i32) {
    %c0_i32 = arith.constant 0 : i32
    %c0_i32_0 = arith.constant 0 : i32
    %c0_i32_1 = arith.constant 0 : i32
    return %arg0, %c0_i32, %c0_i32_0 : i32, i32, i32
  }
  func.func @transform_1(%arg0: i32) -> (i32, i32) {
    %c0_i32 = arith.constant 0 : i32
    %c0_i32_0 = arith.constant 0 : i32
    %c0_i32_1 = arith.constant 0 : i32
    return %c0_i32, %c0_i32_0 : i32, i32
  }
  func.func @transform_2(%arg0: i32) -> (i32, i32) {
    %c0_i32 = arith.constant 0 : i32
    %c0_i32_0 = arith.constant 0 : i32
    %c0_i32_1 = arith.constant 0 : i32
    return %c0_i32, %c0_i32_0 : i32, i32
  }
  func.func @transform_3(%arg0: i32) -> (i32, i32, i32) {
    %c0_i32 = arith.constant 0 : i32
    %c0_i32_0 = arith.constant 0 : i32
    %c0_i32_1 = arith.constant 0 : i32
    return %arg0, %c0_i32, %c0_i32_0 : i32, i32, i32
  }
}

</mosaic_0001>

<llo_original>
// kernel: tpu_custom_call.1
$region0: #{tpu_custom_call.1}
  #allocation0 [shape = 'u32[]', space=smem, size = 0x4, offset = 0x4, fixed_abs, tag = 'smem constant byte address 0x4 - core index']
  #allocation1 [shape = 'u32[144,128]{1,0:T(1,128)}', space=vmem, size = 0x12000, scoped, tag = 'internal scratch']
  %s0 = inlined_call_operand.hbm [shape: f32[2,4,256], index: 0, kind: input, shape index: {}]
  %s1 = inlined_call_operand.vmem [shape: f32[4,2], index: 1, kind: input, shape index: {}]
  %s2 = inlined_call_operand.vmem [shape: f32[2,4], index: 2, kind: input, shape index: {}]
  %s3 = inlined_call_operand.hbm [shape: f32[2,4,256], index: 3, kind: output, shape index: {}]
  %s4 = sld [smem:[#allocation0]]
  $region26: #{tpu_custom_call.1} parent=0
    _
  %s6 = ssub.s32 1, %s4
  %s7 = scalar_select 0, %s6, %s4
  $region1: #{tpu_custom_call.1} parent=0
    #allocation2 [shape = 'u8[8192]{0}', space=vmem, size = 0x2000, scoped, tag = 'input window, operand 0, single buffered']
    #allocation3 [shape = 's32[1]{0}', space=sflag, size = 0x4, scoped, tag = 'scoped memory for tpu_custom_call.1']
    #allocation4 [shape = 's32[1]{0}', space=sflag, size = 0x4, scoped, tag = 'scoped memory for tpu_custom_call.1']
    #allocation5 [shape = 'u8[8192]{0}', space=vmem, size = 0x2000, scoped, tag = 'output window, operand 0, single buffered']
    %8 = vsyncpa [#allocation3], 0
    %9 = vsyncpa [#allocation4], 0
    // Predicated region
    $region2: #{tpu_custom_call.1} parent=1 // pred_check
      _
    $region3: #{tpu_custom_call.1} parent=1 // pred_check_branch
      %11 = sbr.rel (0) target = $region5
    $region4: #{tpu_custom_call.1} parent=1 // pred_region
      %s13 = ssub.s32 256, 256
      %14 = vsyncadd [#allocation3], %s13
      %s15 = sshll.u32 [#allocation2], 4
      %s16 = int_to_ptr.vmem [resolvable:$true] %s15
      %21 = dma.hbm_to_vmem [thread:$0]  %s0, 256, %s16, [#allocation3], 128, 128, 8
    $region5: #{tpu_custom_call.1} parent=1 // pred_fallthru
      _
    // Predicated region
    $region6: #{tpu_custom_call.1} parent=1 // pred_check
      _
    $region7: #{tpu_custom_call.1} parent=1 // pred_check_branch
      %23 = sbr.rel (0) target = $region9
    $region8: #{tpu_custom_call.1} parent=1 // pred_region
      _
    $region9: #{tpu_custom_call.1} parent=1 // pred_fallthru
      _
    // Predicated region
    $region10: #{tpu_custom_call.1} parent=1 // pred_check
      _
    $region11: #{tpu_custom_call.1} parent=1 // pred_check_branch
      %25 = sbr.rel (0) target = $region13
    $region12: #{tpu_custom_call.1} parent=1 // pred_region
      _
    $region13: #{tpu_custom_call.1} parent=1 // pred_fallthru
      _
    // Predicated region
    $region14: #{tpu_custom_call.1} parent=1 // pred_check
      _
    $region15: #{tpu_custom_call.1} parent=1 // pred_check_branch
      %27 = sbr.rel (0) target = $region17
    $region16: #{tpu_custom_call.1} parent=1 // pred_region
      %28 = dma.done [#allocation3], 256
    $region17: #{tpu_custom_call.1} parent=1 // pred_fallthru
      _
    %v29 = vld [vmem:[#allocation2] sm:$0xff]
    %v30 = vld [vmem:[#allocation2 + $0x8] sm:$0xff]
    %v33 = vcombine.high %v29, %v29
    %v34 = vcombine.high %v30, %v30
    %vm37 = vcmask 1043456
    %v38 = vsel %vm37, %v29, 0.0
    %v39 = vsel %vm37, %v33, 0.0
    %v40 = vadd.f32 %v38, %v39
    %41 = vadd.xlane.f32.xlu0 %v40
    %v42 = vpop.xlane.xlu0 %41
    %v43 = vsel %vm37, %v30, 0.0
    %v44 = vsel %vm37, %v34, 0.0
    %v45 = vadd.f32 %v43, %v44
    %46 = vadd.xlane.f32.xlu0 %v45
    %v47 = vpop.xlane.xlu0 %46
    %v48 = vmul.f32 %v42, 0.00390625
    %v49 = vmul.f32 %v47, 0.00390625
    %v50 = vld [vmem:[%s1] sm:$0xf]
    %v53 = vlaneseq
    %v54 = vand.u32 %v53, 127
    %v55 = vlaneseq
    %v56 = vshrl.u32 %v55, 7
    %v57 = vsub.s32 %v54, %v56
    %v58 = vrot.slane %v48, %v57
    %v59 = vlaneseq
    %v60 = vshrl.u32 %v59, 7
    %v61 = vsub.s32 %v54, %v60
    %v62 = vrot.slane %v49, %v61
    %vm63 = vcmask 1041409
    %v64 = vsel %vm63, %v62, %v58
    %vm65 = vcmask 31744
    %v66 = vsel %vm65, %v64, 0
    %v69 = vsel %vm37, %v50, 0
    %71 = vmatprep.subr.mxu0 0.0
    %72 = vmatpush1.msra.mxu0 0.0
    %73 = vmatprep.subr.mxu0 0.0
    %74 = vmatpush1.msra.mxu0 0.0
    %75 = vmatprep.subr.mxu0 0.0
    %76 = vmatpush1.msra.mxu0 0.0
    %77 = vmatprep.subr.mxu0 0.0
    %78 = vmatpush1.msra.mxu0 0.0
    %79 = vmatprep.subr.mxu0 0.0
    %80 = vmatpush1.msra.mxu0 0.0
    %81 = vmatprep.subr.mxu0 0.0
    %82 = vmatpush1.msra.mxu0 0.0
    %83 = vmatprep.subr.mxu0 0.0
    %84 = vmatpush1.msra.mxu0 0.0
    %85 = vmatprep.subr.mxu0 0.0
    %86 = vmatpush1.msra.mxu0 0.0
    %87 = vmatprep.subr.mxu0 0.0
    %88 = vmatpush1.msra.mxu0 0.0
    %89 = vmatprep.subr.mxu0 0.0
    %90 = vmatpush1.msra.mxu0 0.0
    %91 = vmatprep.subr.mxu0 0.0
    %92 = vmatpush1.msra.mxu0 0.0
    %93 = vmatprep.subr.mxu0 0.0
    %94 = vmatpush1.msra.mxu0 0.0
    %95 = vmatprep.subr.mxu0 0.0
    %96 = vmatpush1.msra.mxu0 0.0
    %97 = vmatprep.subr.mxu0 0.0
    %98 = vmatpush1.msra.mxu0 0.0
    %99 = vmatprep.subr.mxu0 0.0
    %100 = vmatpush1.msra.mxu0 0.0
    %101 = vmatprep.subr.mxu0 0.0
    %102 = vmatpush1.msra.mxu0 %v69
    %103 = vmatprep.subr.mxu0 0.0
    %104 = vmatpush2.msra.mxu0 0.0
    %105 = vmatprep.subr.mxu0 0.0
    %106 = vmatpush2.msra.mxu0 0.0
    %107 = vmatprep.subr.mxu0 0.0
    %108 = vmatpush2.msra.mxu0 0.0
    %109 = vmatprep.subr.mxu0 0.0
    %110 = vmatpush2.msra.mxu0 0.0
    %111 = vmatprep.subr.mxu0 0.0
    %112 = vmatpush2.msra.mxu0 0.0
    %113 = vmatprep.subr.mxu0 0.0
    %114 = vmatpush2.msra.mxu0 0.0
    %115 = vmatprep.subr.mxu0 0.0
    %116 = vmatpush2.msra.mxu0 0.0
    %117 = vmatprep.subr.mxu0 0.0
    %118 = vmatpush2.msra.mxu0 0.0
    %119 = vmatprep.subr.mxu0 0.0
    %120 = vmatpush2.msra.mxu0 0.0
    %121 = vmatprep.subr.mxu0 0.0
    %122 = vmatpush2.msra.mxu0 0.0
    %123 = vmatprep.subr.mxu0 0.0
    %124 = vmatpush2.msra.mxu0 0.0
    %125 = vmatprep.subr.mxu0 0.0
    %126 = vmatpush2.msra.mxu0 0.0
    %127 = vmatprep.subr.mxu0 0.0
    %128 = vmatpush2.msra.mxu0 0.0
    %129 = vmatprep.subr.mxu0 0.0
    %130 = vmatpush2.msra.mxu0 0.0
    %131 = vmatprep.subr.mxu0 0.0
    %132 = vmatpush2.msra.mxu0 0.0
    %133 = vmatprep.subr.mxu0 0.0
    %134 = vmatpush2.msra.mxu0 0.0
    %135 = vmatprep.mubr.f32.mxu0 0.0
    %136 = vmatmul.mubr.f32.gmra.mxu0 %v66
    %v137 = vpop.f32.mrf.mxu0
    %v138 = vadd.f32 0.0, %v137
    %v139 = vpop.f32.mrf.mxu0
    %140 = vdwg.mxu0
    %v141 = vmax.f32 %v138, 0.0
    %v142 = vld [vmem:[%s2] sm:$0x3]
    %vm143 = vcmask 15360
    %v145 = vsel %vm143, %v141, 0
    %vm147 = vcmask 1041408
    %v149 = vsel %vm147, %v142, 0
    %151 = vmatprep.subr.mxu0 0.0
    %152 = vmatpush1.msra.mxu0 0.0
    %153 = vmatprep.subr.mxu0 0.0
    %154 = vmatpush1.msra.mxu0 0.0
    %155 = vmatprep.subr.mxu0 0.0
    %156 = vmatpush1.msra.mxu0 0.0
    %157 = vmatprep.subr.mxu0 0.0
    %158 = vmatpush1.msra.mxu0 0.0
    %159 = vmatprep.subr.mxu0 0.0
    %160 = vmatpush1.msra.mxu0 0.0
    %161 = vmatprep.subr.mxu0 0.0
    %162 = vmatpush1.msra.mxu0 0.0
    %163 = vmatprep.subr.mxu0 0.0
    %164 = vmatpush1.msra.mxu0 0.0
    %165 = vmatprep.subr.mxu0 0.0
    %166 = vmatpush1.msra.mxu0 0.0
    %167 = vmatprep.subr.mxu0 0.0
    %168 = vmatpush1.msra.mxu0 0.0
    %169 = vmatprep.subr.mxu0 0.0
    %170 = vmatpush1.msra.mxu0 0.0
    %171 = vmatprep.subr.mxu0 0.0
    %172 = vmatpush1.msra.mxu0 0.0
    %173 = vmatprep.subr.mxu0 0.0
    %174 = vmatpush1.msra.mxu0 0.0
    %175 = vmatprep.subr.mxu0 0.0
    %176 = vmatpush1.msra.mxu0 0.0
    %177 = vmatprep.subr.mxu0 0.0
    %178 = vmatpush1.msra.mxu0 0.0
    %179 = vmatprep.subr.mxu0 0.0
    %180 = vmatpush1.msra.mxu0 0.0
    %181 = vmatprep.subr.mxu0 0.0
    %182 = vmatpush1.msra.mxu0 %v149
    %183 = vmatprep.subr.mxu0 0.0
    %184 = vmatpush2.msra.mxu0 0.0
    %185 = vmatprep.subr.mxu0 0.0
    %186 = vmatpush2.msra.mxu0 0.0
    %187 = vmatprep.subr.mxu0 0.0
    %188 = vmatpush2.msra.mxu0 0.0
    %189 = vmatprep.subr.mxu0 0.0
    %190 = vmatpush2.msra.mxu0 0.0
    %191 = vmatprep.subr.mxu0 0.0
    %192 = vmatpush2.msra.mxu0 0.0
    %193 = vmatprep.subr.mxu0 0.0
    %194 = vmatpush2.msra.mxu0 0.0
    %195 = vmatprep.subr.mxu0 0.0
    %196 = vmatpush2.msra.mxu0 0.0
    %197 = vmatprep.subr.mxu0 0.0
    %198 = vmatpush2.msra.mxu0 0.0
    %199 = vmatprep.subr.mxu0 0.0
    %200 = vmatpush2.msra.mxu0 0.0
    %201 = vmatprep.subr.mxu0 0.0
    %202 = vmatpush2.msra.mxu0 0.0
    %203 = vmatprep.subr.mxu0 0.0
    %204 = vmatpush2.msra.mxu0 0.0
    %205 = vmatprep.subr.mxu0 0.0
    %206 = vmatpush2.msra.mxu0 0.0
    %207 = vmatprep.subr.mxu0 0.0
    %208 = vmatpush2.msra.mxu0 0.0
    %209 = vmatprep.subr.mxu0 0.0
    %210 = vmatpush2.msra.mxu0 0.0
    %211 = vmatprep.subr.mxu0 0.0
    %212 = vmatpush2.msra.mxu0 0.0
    %213 = vmatprep.subr.mxu0 0.0
    %214 = vmatpush2.msra.mxu0 0.0
    %215 = vmatprep.mubr.f32.mxu0 0.0
    %216 = vmatmul.mubr.f32.gmra.mxu0 %v145
    %v217 = vpop.f32.mrf.mxu0
    %v218 = vadd.f32 0.0, %v217
    %v219 = vpop.f32.mrf.mxu0
    %220 = vdwg.mxu0
    %v221 = vxor.u32 %v218, 2147483648
    %v222 = vmul.f32 %v221, 1.442695
    %v223 = vpow.pop %v222
    %v224 = vadd.f32 %v223, 1.0
    %v225 = vrcp.pop %v224
    %v226 = vmul.f32 1.0, %v225
    %v227 = vlaneseq
    %v228 = vshrl.u32 %v227, 7
    %v229 = vsub.s32 0, %v228
    %v230 = vrot.slane %v226, %v229
    %232 = vbcast.lane.b32.xlu0 %v230, 256
    %v233 = vpop.permute.xlu0 %232
    %v234 = vlaneseq
    %v235 = vshrl.u32 %v234, 7
    %v236 = vsub.s32 1, %v235
    %v237 = vrot.slane %v226, %v236
    %239 = vbcast.lane.b32.xlu0 %v237, 256
    %v240 = vpop.permute.xlu0 %239
    %v244 = vunpack.c.l.s4 839922192
    %v245 = vunpack.c.0.s8 %v244
    %v246 = vlaneseq
    %v247 = vshrl.u32 %v246, 7
    %v248 = vsub.s32 %v245, %v247
    %v249 = vrot.slane %v233, %v248
    %v251 = vunpack.c.l.s4 839922192
    %v252 = vunpack.c.0.s8 %v251
    %v253 = vlaneseq
    %v254 = vshrl.u32 %v253, 7
    %v255 = vsub.s32 %v252, %v254
    %v256 = vrot.slane %v240, %v255
    %v259 = vmul.f32 %v29, %v249
    %v260 = vmul.f32 %v30, %v256
    %261 = vst [vmem:[#allocation5] sm:$0xff] %v259
    %262 = vst [vmem:[#allocation5 + $0x8] sm:$0xff] %v260
    // Predicated region
    $region18: #{tpu_custom_call.1} parent=1 // pred_check
      _
    $region19: #{tpu_custom_call.1} parent=1 // pred_check_branch
      %264 = sbr.rel (0) target = $region21
    $region20: #{tpu_custom_call.1} parent=1 // pred_region
      %s266 = ssub.s32 256, 256
      %267 = vsyncadd [#allocation4], %s266
      %s268 = sshll.u32 [#allocation5], 4
      %s269 = int_to_ptr.vmem [resolvable:$true] %s268
      %274 = dma.vmem_to_hbm [thread:$0]  %s269, 256, %s3, [#allocation4], 128, 128, 8
    $region21: #{tpu_custom_call.1} parent=1 // pred_fallthru
      _
    // Predicated region
    $region22: #{tpu_custom_call.1} parent=1 // pred_check
      _
    $region23: #{tpu_custom_call.1} parent=1 // pred_check_branch
      %276 = sbr.rel (0) target = $region25
    $region24: #{tpu_custom_call.1} parent=1 // pred_region
      %277 = dma.done [#allocation4], 256
    $region25: #{tpu_custom_call.1} parent=1 // pred_fallthru
      _
    %278 = vsyncpa [#allocation3], 1
    %279 = vsyncpa [#allocation4], 1

</llo_original>
